<compile_context>
chip_gen: v7x
topology: tpu7x:2x2x1
jax: 0.10.0
libtpu: 0.0.40
codegen_flags: <defaults>
</compile_context>

<pallas_src>
import functools

import jax
import jax.numpy as jnp
from jax.experimental import pallas as pl
from jax.experimental.pallas import tpu as pltpu


# ------------------------------ fused kernel --------------------------------
def mm_input_projection_kernel(x_ref, pool_ref, norm_w_ref, proj_ref, o_ref,
                               normed_sc, *, eps, block_b, tokens):
    """AvgPool (as matmul) -> fp32 RMSNorm -> projection, for a block of images.

    x_ref      : [G, PP, C]   input dtype (G = block_b images)
    pool_ref   : [TT, PP]     compute dtype; rows are 1/k^2 pooling windows
    norm_w_ref : [1, C]       float32 (stored weight + 1 baked in)
    proj_ref   : [C, TN]      compute dtype (one H tile of the projection weight)
    o_ref      : [G, TT, TN]  input dtype
    normed_sc  : [G*TT, C]    compute dtype scratch, reused across the H tiles
    """
    in_dtype = x_ref.dtype

    # Pool + RMSNorm only once per batch block (H axis is the inner grid dim).
    @pl.when(pl.program_id(1) == 0)
    def _():
        pool = pool_ref[...]
        w = norm_w_ref[...]
        for g in range(block_b):                                  # static unroll
            xg = x_ref[g].astype(pool.dtype)                      # [PP, C]
            pooled = jnp.dot(pool, xg, preferred_element_type=jnp.float32)
            # AvgPool2d output is in the input dtype; RMSNorm math is fp32.
            pooled = pooled.astype(in_dtype).astype(jnp.float32)
            var = jnp.mean(pooled * pooled, axis=-1, keepdims=True)
            normed = pooled * jax.lax.rsqrt(var + eps) * w        # fp32
            # Module casts normed back to the checkpoint dtype before the matmul.
            normed_sc[pl.ds(g * tokens, tokens), :] = normed.astype(normed_sc.dtype)

    # Single [G*TT, C] @ [C, TN] projection; lane-dense (TN-wide) output store.
    out = jnp.dot(normed_sc[...], proj_ref[...], preferred_element_type=jnp.float32)
    o_ref[...] = out.reshape(o_ref.shape).astype(o_ref.dtype)


# -------------------------------- wrapper ------------------------------------
def gemma3_mm_input_projection(vision_outputs, pool_mat, norm_w_plus_one, proj_w,
                               *, eps=1e-6, block_b=4, block_h=None,
                               vmem_limit_bytes=None):
    b, pp, c = vision_outputs.shape
    tt = pool_mat.shape[0]
    h = proj_w.shape[1]
    compute_dtype = vision_outputs.dtype          # checkpoint dtype (.type_as)

    # --- batch blocking (amortize per-grid-step overhead) ---------------------
    block_b = max(1, min(block_b, b))
    n_blocks = pl.cdiv(b, block_b)                # keep >= 2 for v7x megacore
    b_pad = n_blocks * block_b
    if b_pad != b:
        vision_outputs = jnp.pad(
            vision_outputs, ((0, b_pad - b), (0, 0), (0, 0)))

    # --- H tiling (bounds VMEM at production shapes, lane-dense output) -------
    if block_h is None:
        block_h = h
    assert h % block_h == 0 and block_h % 128 == 0, "block_h must tile H, x128"

    pool = pool_mat.astype(compute_dtype)         # 1/k^2 is exact in bf16
    proj = proj_w.astype(compute_dtype)
    norm_w2 = norm_w_plus_one.reshape(1, c).astype(jnp.float32)

    kernel = functools.partial(mm_input_projection_kernel,
                               eps=eps, block_b=block_b, tokens=tt)

    out = pl.pallas_call(
        kernel,
        out_shape=jax.ShapeDtypeStruct((b_pad, tt, h), vision_outputs.dtype),
        grid=(n_blocks, h // block_h),
        in_specs=[
            pl.BlockSpec((block_b, pp, c), lambda i, j: (i, 0, 0)),  # images
            pl.BlockSpec((tt, pp), lambda i, j: (0, 0)),             # pool matrix
            pl.BlockSpec((1, c), lambda i, j: (0, 0)),               # rmsnorm weight
            pl.BlockSpec((c, block_h), lambda i, j: (0, j)),         # proj H tile
        ],
        out_specs=pl.BlockSpec((block_b, tt, block_h), lambda i, j: (i, 0, j)),
        scratch_shapes=[pltpu.VMEM((block_b * tt, c), compute_dtype)],
        compiler_params=pltpu.CompilerParams(
            dimension_semantics=("parallel", "arbitrary"),
            vmem_limit_bytes=vmem_limit_bytes),
    )(vision_outputs, pool, norm_w2, proj)

    return out[:b] if b_pad != b else out


def build_pool_matrix(patches_per_image, kernel_size, dtype=jnp.float32):
    """[tokens, patches] matrix M with M[t, p] = 1/k^2 iff patch p is in window t."""
    p, k = patches_per_image, kernel_size
    t_side = p // k
    pidx = jnp.arange(p * p, dtype=jnp.int32)
    py, px = pidx // p, pidx % p
    patch_token = (py // k) * t_side + (px // k)                     # [P*P]
    tok = jnp.arange(t_side * t_side, dtype=jnp.int32)
    return (tok[:, None] == patch_token[None, :]).astype(dtype) / float(k * k)


# ------------------------------ pure-JAX reference ----------------------------
def reference_forward(vision_outputs, norm_w_plus_one, proj_w,
                      patches_per_image, kernel_size, eps):
    """Transcription of the PyTorch module (validation only)."""
    dtype = vision_outputs.dtype
    b, pp, c = vision_outputs.shape
    p, k = patches_per_image, kernel_size
    t = p // k
    x = jnp.transpose(vision_outputs.astype(jnp.float32), (0, 2, 1))
    x = x.reshape(b, c, p, p)
    pooled = x.reshape(b, c, t, k, t, k).mean(axis=(3, 5)).astype(dtype)  # AvgPool2d
    pooled = pooled.reshape(b, c, t * t).transpose(0, 2, 1)               # [B, TT, C]
    xf = pooled.astype(jnp.float32)
    var = jnp.mean(xf * xf, axis=-1, keepdims=True)
    normed = xf * jax.lax.rsqrt(var + eps) * norm_w_plus_one.astype(jnp.float32)
    normed = normed.astype(dtype)                                          # checkpoint dtype
    out = jnp.einsum("btc,ch->bth", normed, proj_w.astype(dtype),
                     preferred_element_type=jnp.float32,
                     precision=jax.lax.Precision.HIGHEST)
    return out.astype(dtype)


# --------------------------------- main ---------------------------------------
if __name__ == "__main__":
    # Small shapes consistent with the module:
    #   patches_per_image = image_size // patch_size = 16
    #   tokens_per_side   = sqrt(mm_tokens_per_image) = 4  ->  kernel_size = 4
    #   vision hidden C = 128, text hidden H = 256, batch = 6 images
    B, P, KSZ = 6, 16, 4
    C, H = 128, 256
    EPS = 1e-6
    PP, TT = P * P, (P // KSZ) ** 2

    key = jax.random.PRNGKey(0)
    k0, k1, k2 = jax.random.split(key, 3)
    vision_f32 = jax.random.normal(k0, (B, PP, C), dtype=jnp.float32)
    # Gemma3FastRMSNorm.load() adds +1 to the stored weight; bake it in here.
    norm_w_plus_one = 0.02 * jax.random.normal(k1, (C,), dtype=jnp.float32) + 1.0
    proj_f32 = 0.02 * jax.random.normal(k2, (C, H), dtype=jnp.float32)
    pool_mat = build_pool_matrix(P, KSZ)

    # --- production path: bf16 checkpoint dtype, block_b=4 (2 batch blocks),
    #     block_h=128 (exercises the H-tiling axis) -------------------------------
    v_bf16 = vision_f32.astype(jnp.bfloat16)
    p_bf16 = proj_f32.astype(jnp.bfloat16)
    out_bf16 = gemma3_mm_input_projection(v_bf16, pool_mat, norm_w_plus_one, p_bf16,
                                          eps=EPS, block_b=4, block_h=128)
    out_bf16 = jax.block_until_ready(out_bf16)
    ref_bf16 = reference_forward(v_bf16, norm_w_plus_one, p_bf16, P, KSZ, EPS)
    assert out_bf16.shape == (B, TT, H) and out_bf16.dtype == jnp.bfloat16
    assert bool(jnp.allclose(out_bf16.astype(jnp.float32),
                             ref_bf16.astype(jnp.float32),
                             rtol=2e-2, atol=1e-2)), "bf16 mismatch vs reference"

    # --- fp32 exactness check (same kernel, tight tolerance) ---------------------
    out_f32 = gemma3_mm_input_projection(vision_f32, pool_mat, norm_w_plus_one,
                                         proj_f32, eps=EPS, block_b=4, block_h=H)
    out_f32 = jax.block_until_ready(out_f32)
    ref_f32 = reference_forward(vision_f32, norm_w_plus_one, proj_f32, P, KSZ, EPS)
    assert out_f32.shape == (B, TT, H) and out_f32.dtype == jnp.float32
    assert bool(jnp.allclose(out_f32, ref_f32,
                             rtol=1e-4, atol=1e-5)), "fp32 mismatch vs reference"

    print("KERNEL_OK")
</pallas_src>

<mosaic_0001>
module attributes {stable_mosaic.version = 11 : i64} {
  func.func @mm_input_projection_kernel(%arg0: i32, %arg1: i32, %arg2: memref<4x256x128xbf16, #tpu.memory_space<vmem>>, %arg3: memref<16x256xbf16, #tpu.memory_space<vmem>>, %arg4: memref<1x128xf32, #tpu.memory_space<vmem>>, %arg5: memref<128x128xbf16, #tpu.memory_space<vmem>>, %arg6: memref<4x16x128xbf16, #tpu.memory_space<vmem>>, %arg7: memref<64x128xbf16, #tpu.memory_space<vmem>>) attributes {dimension_semantics = [#tpu.dimension_semantics<parallel>, #tpu.dimension_semantics<arbitrary>], iteration_bounds = array<i64: 2, 2>, scalar_prefetch = 0 : i64, scratch_operands = 1 : i64, tpu.core_type = #tpu.core_type<tc>, window_params = [{transform_indices = @transform_0, window_bounds = array<i64: 4, 256, 128>}, {pipeline_mode = #tpu.pipeline_mode<synchronous>, transform_indices = @transform_1, window_bounds = array<i64: 16, 256>}, {pipeline_mode = #tpu.pipeline_mode<synchronous>, transform_indices = @transform_2, window_bounds = array<i64: 1, 128>}, {transform_indices = @transform_3, window_bounds = array<i64: 128, 128>}, {transform_indices = @transform_4, window_bounds = array<i64: 4, 16, 128>}]} {
    %c0_i32 = arith.constant 0 : i32
    %0 = arith.cmpi eq, %arg1, %c0_i32 : i32
    %1 = arith.extui %0 : i1 to i32
    %c0_i32_0 = arith.constant 0 : i32
    %2 = arith.cmpi ne, %1, %c0_i32_0 : i32
    scf.if %2 {
      %c0_7 = arith.constant 0 : index
      %c0_8 = arith.constant 0 : index
      %9 = vector.load %arg3[%c0_7, %c0_8] : memref<16x256xbf16, #tpu.memory_space<vmem>>, vector<16x256xbf16>
      %c0_9 = arith.constant 0 : index
      %c0_10 = arith.constant 0 : index
      %10 = vector.load %arg4[%c0_9, %c0_10] : memref<1x128xf32, #tpu.memory_space<vmem>>, vector<1x128xf32>
      %c0_11 = arith.constant 0 : index
      %c0_12 = arith.constant 0 : index
      %c0_13 = arith.constant 0 : index
      %11 = vector.load %arg2[%c0_11, %c0_12, %c0_13] : memref<4x256x128xbf16, #tpu.memory_space<vmem>>, vector<1x256x128xbf16>
      %12 = vector.shape_cast %11 : vector<1x256x128xbf16> to vector<256x128xbf16>
      %cst_14 = arith.constant dense<0.000000e+00> : vector<16x128xf32>
      %13 = tpu.matmul %9, %12, %cst_14 {dimension_numbers = #tpu.dot_dimension_numbers<[1], [0], [0], [1], [0, 0, 1, 1], [], []>} : vector<16x256xbf16>, vector<256x128xbf16>, vector<16x128xf32> -> vector<16x128xf32>
      %14 = arith.truncf %13 : vector<16x128xf32> to vector<16x128xbf16>
      %15 = arith.extf %14 : vector<16x128xbf16> to vector<16x128xf32>
      %16 = arith.mulf %15, %15 : vector<16x128xf32>
      %cst_15 = arith.constant dense<0.000000e+00> : vector<16xf32>
      %17 = vector.multi_reduction <add>, %16, %cst_15 [1] : vector<16x128xf32> to vector<16xf32>
      %18 = vector.shape_cast %17 : vector<16xf32> to vector<16x1xf32>
      %cst_16 = arith.constant 1.280000e+02 : f32
      %19 = vector.broadcast %cst_16 : f32 to vector<16x1xf32>
      %20 = arith.divf %18, %19 : vector<16x1xf32>
      %cst_17 = arith.constant 9.99999997E-7 : f32
      %21 = vector.broadcast %cst_17 : f32 to vector<16x1xf32>
      %22 = arith.addf %20, %21 : vector<16x1xf32>
      %23 = math.rsqrt %22 : vector<16x1xf32>
      %24 = vector.broadcast %23 : vector<16x1xf32> to vector<16x128xf32>
      %25 = arith.mulf %15, %24 : vector<16x128xf32>
      %26 = vector.broadcast %10 : vector<1x128xf32> to vector<16x128xf32>
      %27 = arith.mulf %25, %26 : vector<16x128xf32>
      %28 = arith.truncf %27 : vector<16x128xf32> to vector<16x128xbf16>
      %c0_18 = arith.constant 0 : index
      %c0_19 = arith.constant 0 : index
      %29 = vector.load %arg7[%c0_18, %c0_19] : memref<64x128xbf16, #tpu.memory_space<vmem>>, vector<16x128xbf16>
      tpu.vector_store %arg7[%c0_18, %c0_19], %28 {strides = array<i32>} : memref<64x128xbf16, #tpu.memory_space<vmem>>, vector<16x128xbf16>,
      %c1 = arith.constant 1 : index
      %c0_20 = arith.constant 0 : index
      %c0_21 = arith.constant 0 : index
      %30 = vector.load %arg2[%c1, %c0_20, %c0_21] : memref<4x256x128xbf16, #tpu.memory_space<vmem>>, vector<1x256x128xbf16>
      %31 = vector.shape_cast %30 : vector<1x256x128xbf16> to vector<256x128xbf16>
      %cst_22 = arith.constant dense<0.000000e+00> : vector<16x128xf32>
      %32 = tpu.matmul %9, %31, %cst_22 {dimension_numbers = #tpu.dot_dimension_numbers<[1], [0], [0], [1], [0, 0, 1, 1], [], []>} : vector<16x256xbf16>, vector<256x128xbf16>, vector<16x128xf32> -> vector<16x128xf32>
      %33 = arith.truncf %32 : vector<16x128xf32> to vector<16x128xbf16>
      %34 = arith.extf %33 : vector<16x128xbf16> to vector<16x128xf32>
      %35 = arith.mulf %34, %34 : vector<16x128xf32>
      %cst_23 = arith.constant dense<0.000000e+00> : vector<16xf32>
      %36 = vector.multi_reduction <add>, %35, %cst_23 [1] : vector<16x128xf32> to vector<16xf32>
      %37 = vector.shape_cast %36 : vector<16xf32> to vector<16x1xf32>
      %cst_24 = arith.constant 1.280000e+02 : f32
      %38 = vector.broadcast %cst_24 : f32 to vector<16x1xf32>
      %39 = arith.divf %37, %38 : vector<16x1xf32>
      %cst_25 = arith.constant 9.99999997E-7 : f32
      %40 = vector.broadcast %cst_25 : f32 to vector<16x1xf32>
      %41 = arith.addf %39, %40 : vector<16x1xf32>
      %42 = math.rsqrt %41 : vector<16x1xf32>
      %43 = vector.broadcast %42 : vector<16x1xf32> to vector<16x128xf32>
      %44 = arith.mulf %34, %43 : vector<16x128xf32>
      %45 = vector.broadcast %10 : vector<1x128xf32> to vector<16x128xf32>
      %46 = arith.mulf %44, %45 : vector<16x128xf32>
      %47 = arith.truncf %46 : vector<16x128xf32> to vector<16x128xbf16>
      %c16 = arith.constant 16 : index
      %c0_26 = arith.constant 0 : index
      %48 = vector.load %arg7[%c16, %c0_26] : memref<64x128xbf16, #tpu.memory_space<vmem>>, vector<16x128xbf16>
      tpu.vector_store %arg7[%c16, %c0_26], %47 {strides = array<i32>} : memref<64x128xbf16, #tpu.memory_space<vmem>>, vector<16x128xbf16>,
      %c2 = arith.constant 2 : index
      %c0_27 = arith.constant 0 : index
      %c0_28 = arith.constant 0 : index
      %49 = vector.load %arg2[%c2, %c0_27, %c0_28] : memref<4x256x128xbf16, #tpu.memory_space<vmem>>, vector<1x256x128xbf16>
      %50 = vector.shape_cast %49 : vector<1x256x128xbf16> to vector<256x128xbf16>
      %cst_29 = arith.constant dense<0.000000e+00> : vector<16x128xf32>
      %51 = tpu.matmul %9, %50, %cst_29 {dimension_numbers = #tpu.dot_dimension_numbers<[1], [0], [0], [1], [0, 0, 1, 1], [], []>} : vector<16x256xbf16>, vector<256x128xbf16>, vector<16x128xf32> -> vector<16x128xf32>
      %52 = arith.truncf %51 : vector<16x128xf32> to vector<16x128xbf16>
      %53 = arith.extf %52 : vector<16x128xbf16> to vector<16x128xf32>
      %54 = arith.mulf %53, %53 : vector<16x128xf32>
      %cst_30 = arith.constant dense<0.000000e+00> : vector<16xf32>
      %55 = vector.multi_reduction <add>, %54, %cst_30 [1] : vector<16x128xf32> to vector<16xf32>
      %56 = vector.shape_cast %55 : vector<16xf32> to vector<16x1xf32>
      %cst_31 = arith.constant 1.280000e+02 : f32
      %57 = vector.broadcast %cst_31 : f32 to vector<16x1xf32>
      %58 = arith.divf %56, %57 : vector<16x1xf32>
      %cst_32 = arith.constant 9.99999997E-7 : f32
      %59 = vector.broadcast %cst_32 : f32 to vector<16x1xf32>
      %60 = arith.addf %58, %59 : vector<16x1xf32>
      %61 = math.rsqrt %60 : vector<16x1xf32>
      %62 = vector.broadcast %61 : vector<16x1xf32> to vector<16x128xf32>
      %63 = arith.mulf %53, %62 : vector<16x128xf32>
      %64 = vector.broadcast %10 : vector<1x128xf32> to vector<16x128xf32>
      %65 = arith.mulf %63, %64 : vector<16x128xf32>
      %66 = arith.truncf %65 : vector<16x128xf32> to vector<16x128xbf16>
      %c32 = arith.constant 32 : index
      %c0_33 = arith.constant 0 : index
      %67 = vector.load %arg7[%c32, %c0_33] : memref<64x128xbf16, #tpu.memory_space<vmem>>, vector<16x128xbf16>
      tpu.vector_store %arg7[%c32, %c0_33], %66 {strides = array<i32>} : memref<64x128xbf16, #tpu.memory_space<vmem>>, vector<16x128xbf16>,
      %c3 = arith.constant 3 : index
      %c0_34 = arith.constant 0 : index
      %c0_35 = arith.constant 0 : index
      %68 = vector.load %arg2[%c3, %c0_34, %c0_35] : memref<4x256x128xbf16, #tpu.memory_space<vmem>>, vector<1x256x128xbf16>
      %69 = vector.shape_cast %68 : vector<1x256x128xbf16> to vector<256x128xbf16>
      %cst_36 = arith.constant dense<0.000000e+00> : vector<16x128xf32>
      %70 = tpu.matmul %9, %69, %cst_36 {dimension_numbers = #tpu.dot_dimension_numbers<[1], [0], [0], [1], [0, 0, 1, 1], [], []>} : vector<16x256xbf16>, vector<256x128xbf16>, vector<16x128xf32> -> vector<16x128xf32>
      %71 = arith.truncf %70 : vector<16x128xf32> to vector<16x128xbf16>
      %72 = arith.extf %71 : vector<16x128xbf16> to vector<16x128xf32>
      %73 = arith.mulf %72, %72 : vector<16x128xf32>
      %cst_37 = arith.constant dense<0.000000e+00> : vector<16xf32>
      %74 = vector.multi_reduction <add>, %73, %cst_37 [1] : vector<16x128xf32> to vector<16xf32>
      %75 = vector.shape_cast %74 : vector<16xf32> to vector<16x1xf32>
      %cst_38 = arith.constant 1.280000e+02 : f32
      %76 = vector.broadcast %cst_38 : f32 to vector<16x1xf32>
      %77 = arith.divf %75, %76 : vector<16x1xf32>
      %cst_39 = arith.constant 9.99999997E-7 : f32
      %78 = vector.broadcast %cst_39 : f32 to vector<16x1xf32>
      %79 = arith.addf %77, %78 : vector<16x1xf32>
      %80 = math.rsqrt %79 : vector<16x1xf32>
      %81 = vector.broadcast %80 : vector<16x1xf32> to vector<16x128xf32>
      %82 = arith.mulf %72, %81 : vector<16x128xf32>
      %83 = vector.broadcast %10 : vector<1x128xf32> to vector<16x128xf32>
      %84 = arith.mulf %82, %83 : vector<16x128xf32>
      %85 = arith.truncf %84 : vector<16x128xf32> to vector<16x128xbf16>
      %c48 = arith.constant 48 : index
      %c0_40 = arith.constant 0 : index
      %86 = vector.load %arg7[%c48, %c0_40] : memref<64x128xbf16, #tpu.memory_space<vmem>>, vector<16x128xbf16>
      tpu.vector_store %arg7[%c48, %c0_40], %85 {strides = array<i32>} : memref<64x128xbf16, #tpu.memory_space<vmem>>, vector<16x128xbf16>,
    } else {
    }
    %c0 = arith.constant 0 : index
    %c0_1 = arith.constant 0 : index
    %3 = vector.load %arg7[%c0, %c0_1] : memref<64x128xbf16, #tpu.memory_space<vmem>>, vector<64x128xbf16>
    %c0_2 = arith.constant 0 : index
    %c0_3 = arith.constant 0 : index
    %4 = vector.load %arg5[%c0_2, %c0_3] : memref<128x128xbf16, #tpu.memory_space<vmem>>, vector<128x128xbf16>
    %cst = arith.constant dense<0.000000e+00> : vector<64x128xf32>
    %5 = tpu.matmul %3, %4, %cst {dimension_numbers = #tpu.dot_dimension_numbers<[1], [0], [0], [1], [0, 0, 1, 1], [], []>} : vector<64x128xbf16>, vector<128x128xbf16>, vector<64x128xf32> -> vector<64x128xf32>
    %6 = vector.shape_cast %5 : vector<64x128xf32> to vector<4x16x128xf32>
    %7 = arith.truncf %6 : vector<4x16x128xf32> to vector<4x16x128xbf16>
    %c0_4 = arith.constant 0 : index
    %c0_5 = arith.constant 0 : index
    %c0_6 = arith.constant 0 : index
    %8 = vector.load %arg6[%c0_4, %c0_5, %c0_6] : memref<4x16x128xbf16, #tpu.memory_space<vmem>>, vector<4x16x128xbf16>
    tpu.vector_store %arg6[%c0_4, %c0_5, %c0_6], %7 {strides = array<i32>} : memref<4x16x128xbf16, #tpu.memory_space<vmem>>, vector<4x16x128xbf16>,
    return
  }
  func.func @transform_0(%arg0: i32, %arg1: i32) -> (i32, i32, i32) {
    %c0_i32 = arith.constant 0 : i32
    %c0_i32_0 = arith.constant 0 : i32
    %c0_i32_1 = arith.constant 0 : i32
    return %arg0, %c0_i32, %c0_i32_0 : i32, i32, i32
  }
  func.func @transform_1(%arg0: i32, %arg1: i32) -> (i32, i32) {
    %c0_i32 = arith.constant 0 : i32
    %c0_i32_0 = arith.constant 0 : i32
    %c0_i32_1 = arith.constant 0 : i32
    return %c0_i32, %c0_i32_0 : i32, i32
  }
  func.func @transform_2(%arg0: i32, %arg1: i32) -> (i32, i32) {
    %c0_i32 = arith.constant 0 : i32
    %c0_i32_0 = arith.constant 0 : i32
    %c0_i32_1 = arith.constant 0 : i32
    return %c0_i32, %c0_i32_0 : i32, i32
  }
  func.func @transform_3(%arg0: i32, %arg1: i32) -> (i32, i32) {
    %c0_i32 = arith.constant 0 : i32
    %c0_i32_0 = arith.constant 0 : i32
    return %c0_i32, %arg1 : i32, i32
  }
  func.func @transform_4(%arg0: i32, %arg1: i32) -> (i32, i32, i32) {
    %c0_i32 = arith.constant 0 : i32
    %c0_i32_0 = arith.constant 0 : i32
    return %arg0, %c0_i32, %arg1 : i32, i32, i32
  }
}

</mosaic_0001>

<llo_original>
// kernel: tpu_custom_call.1
$region0: #{tpu_custom_call.1}
  #allocation0 [shape = 'u32[]', space=smem, size = 0x4, offset = 0x4, fixed_abs, tag = 'smem constant byte address 0x4 - core index']
  #allocation1 [shape = 'u32[144,128]{1,0:T(1,128)}', space=vmem, size = 0x12000, scoped, tag = 'internal scratch']
  #allocation2 [shape = 'bf16[64,128]{1,0:T(16,128)(2,1)}', space=vmem, size = 0x4000, scoped, tag = 'scratch operand']
  %s0 = inlined_call_operand.hbm [shape: bf16[8,256,128], index: 0, kind: input, shape index: {}]
  %s1 = inlined_call_operand.hbm [shape: bf16[16,256], index: 1, kind: input, shape index: {}]
  %s2 = inlined_call_operand.vmem [shape: f32[1,128], index: 2, kind: input, shape index: {}]
  %s3 = inlined_call_operand.hbm [shape: bf16[128,256], index: 3, kind: input, shape index: {}]
  %s4 = inlined_call_operand.hbm [shape: bf16[8,16,256], index: 4, kind: output, shape index: {}]
  %s5 = sld [smem:[#allocation0]]
  $region65: #{tpu_custom_call.1} parent=0
    _
  %s7 = ssub.s32 1, %s5
  %s8 = scalar_select 0, %s7, %s5
  $region1: #{tpu_custom_call.1} parent=0
    #allocation3 [shape = 'u8[524288]{0}', space=vmem, size = 0x80000, scoped, tag = 'input window, operand 0']
    #allocation4 [shape = 's32[2]{0}', space=sflag, size = 0x8, scoped, tag = 'scoped memory for tpu_custom_call.1']
    #allocation5 [shape = 's32[2]{0}', space=sflag, size = 0x8, scoped, tag = 'scoped memory for tpu_custom_call.1']
    #allocation6 [shape = 'u8[8192]{0}', space=vmem, size = 0x2000, scoped, tag = 'input window, operand 1, single buffered']
    #allocation7 [shape = 's32[1]{0}', space=sflag, size = 0x4, scoped, tag = 'scoped memory for tpu_custom_call.1']
    #allocation8 [shape = 'u8[65536]{0}', space=vmem, size = 0x10000, scoped, tag = 'input window, operand 3']
    #allocation9 [shape = 'u8[32768]{0}', space=vmem, size = 0x8000, scoped, tag = 'output window, operand 0']
    %9 = vsyncpa [#allocation4], 0
    %s10 = scalar_lea.sflag [#allocation4], 1
    %11 = vsyncpa %s10, 0
    %12 = vsyncpa [#allocation7], 0
    %13 = vsyncpa [#allocation5], 0
    %s14 = scalar_lea.sflag [#allocation5], 1
    %15 = vsyncpa %s14, 0
    loop: start=0, step=1, limit=6
    $region2: #{tpu_custom_call.1} parent=1 // loop_pre_header
      _
    $region3: #{tpu_custom_call.1} parent=1 // loop_header
      %s17 = sphi 0, %s21
      %p18 = scmp.ge.s32.totalorder %s17, 6
      %s24 = sphi 0, %s36
      %s25 = sphi 0, %s32
      %s26 = sphi 0, %s24
      %s27 = sphi 0, %s25
      %s28 = sphi 0, %s26
      %s29 = sphi 0, %s27
      %s39 = sphi 0, %s41
      %s42 = sphi 0, %s39
      %s43 = sphi 0, %s42
      %s59 = sphi 0, %s43
      %s63 = sphi 0, %s63
      %s65 = sphi 0, %s63
      %s66 = sphi 0, %s65
      %s80 = sphi 0, %s66
      %s84 = sphi 0, %s84
      %s86 = sphi 0, %s84
      %s87 = sphi 0, %s86
      %s101 = sphi 0, %s87
      %s107 = sphi 0, %s109
      %s110 = sphi 0, %s107
      %s111 = sphi 0, %s110
      %s127 = sphi 0, %s111
      %s135 = sphi 0, %s137
      %s138 = sphi 0, %s135
      %s139 = sphi 0, %s138
      %s155 = sphi 0, %s139
    $region4: #{tpu_custom_call.1} parent=1 // loop_header_branch
      %20 = sbr.rel (%p18) target = $region8
    $region5: #{tpu_custom_call.1} parent=1 // loop_body
      %s22 = ssub.s32 %s17, 1
      %s23 = ssub.s32 %s17, 2
      %s30 = sadd.s32 1, %s25
      %p31 = scmp.ge.s32.totalorder %s30, 2
      %s32 = scalar_select %p31, 0, %s30
      %s33 = sadd.s32 1, %s24
      %s34 = scalar_select %p31, %s33, %s24
      %p35 = scmp.ge.s32.totalorder %s34, 2
      %s36 = scalar_select %p35, 0, %s34
      %s37 = ssub.s32 %s24, %s36
      %p38 = scmp.eq.s32.totalorder %s37, 0
      %s40 = sadd.s32 %s39, 1
      %s41 = scalar_select %p38, %s39, %s40
      %p44 = pneg %p38
      %p45 = scmp.eq.s32.totalorder %s17, 3
      %p46 = por %p44, %p45
      %p47 = scmp.ne.s32.totalorder %s39, %s42
      %p48 = scmp.eq.s32.totalorder %s17, 0
      %p49 = por %p47, %p48
      %p50 = scmp.ne.s32.totalorder %s39, %s42
      %p51 = scmp.eq.s32.totalorder %s22, 3
      %p52 = por %p50, %p51
      %p53 = scmp.ne.s32.totalorder %s42, %s43
      %p54 = scmp.eq.s32.totalorder %s22, 0
      %p55 = por %p53, %p54
      %p56 = scmp.ne.s32.totalorder %s42, %s43
      %p57 = scmp.eq.s32.totalorder %s23, 3
      %p58 = por %p56, %p57
      %p60 = scmp.ne.s32.totalorder %s43, %s59
      %p61 = scmp.eq.s32.totalorder %s23, 0
      %p62 = por %p60, %p61
      %s64 = sadd.s32 %s63, 1
      %p67 = scmp.eq.s32.totalorder %s17, 3
      %p68 = scmp.ne.s32.totalorder %s63, %s65
      %p69 = scmp.eq.s32.totalorder %s17, 0
      %p70 = por %p68, %p69
      %p71 = scmp.ne.s32.totalorder %s63, %s65
      %p72 = scmp.eq.s32.totalorder %s22, 3
      %p73 = por %p71, %p72
      %p74 = scmp.ne.s32.totalorder %s65, %s66
      %p75 = scmp.eq.s32.totalorder %s22, 0
      %p76 = por %p74, %p75
      %p77 = scmp.ne.s32.totalorder %s65, %s66
      %p78 = scmp.eq.s32.totalorder %s23, 3
      %p79 = por %p77, %p78
      %p81 = scmp.ne.s32.totalorder %s66, %s80
      %p82 = scmp.eq.s32.totalorder %s23, 0
      %p83 = por %p81, %p82
      %s85 = sadd.s32 %s84, 1
      %p88 = scmp.eq.s32.totalorder %s17, 3
      %p89 = scmp.ne.s32.totalorder %s84, %s86
      %p90 = scmp.eq.s32.totalorder %s17, 0
      %p91 = por %p89, %p90
      %p92 = scmp.ne.s32.totalorder %s84, %s86
      %p93 = scmp.eq.s32.totalorder %s22, 3
      %p94 = por %p92, %p93
      %p95 = scmp.ne.s32.totalorder %s86, %s87
      %p96 = scmp.eq.s32.totalorder %s22, 0
      %p97 = por %p95, %p96
      %p98 = scmp.ne.s32.totalorder %s86, %s87
      %p99 = scmp.eq.s32.totalorder %s23, 3
      %p100 = por %p98, %p99
      %p102 = scmp.ne.s32.totalorder %s87, %s101
      %p103 = scmp.eq.s32.totalorder %s23, 0
      %p104 = por %p102, %p103
      %s105 = ssub.s32 %s25, %s32
      %p106 = scmp.eq.s32.totalorder %s105, 0
      %s108 = sadd.s32 %s107, 1
      %s109 = scalar_select %p106, %s107, %s108
      %p112 = pneg %p106
      %p113 = scmp.eq.s32.totalorder %s17, 3
      %p114 = por %p112, %p113
      %p115 = scmp.ne.s32.totalorder %s107, %s110
      %p116 = scmp.eq.s32.totalorder %s17, 0
      %p117 = por %p115, %p116
      %p118 = scmp.ne.s32.totalorder %s107, %s110
      %p119 = scmp.eq.s32.totalorder %s22, 3
      %p120 = por %p118, %p119
      %p121 = scmp.ne.s32.totalorder %s110, %s111
      %p122 = scmp.eq.s32.totalorder %s22, 0
      %p123 = por %p121, %p122
      %p124 = scmp.ne.s32.totalorder %s110, %s111
      %p125 = scmp.eq.s32.totalorder %s23, 3
      %p126 = por %p124, %p125
      %p128 = scmp.ne.s32.totalorder %s111, %s127
      %p129 = scmp.eq.s32.totalorder %s23, 0
      %p130 = por %p128, %p129
      %s131 = ssub.s32 %s24, %s36
      %s132 = ssub.s32 %s25, %s32
      %s133 = sor.u32 %s131, %s132
      %p134 = scmp.eq.s32.totalorder %s133, 0
      %s136 = sadd.s32 %s135, 1
      %s137 = scalar_select %p134, %s135, %s136
      %p140 = pneg %p134
      %p141 = scmp.eq.s32.totalorder %s17, 3
      %p142 = por %p140, %p141
      %p143 = scmp.ne.s32.totalorder %s135, %s138
      %p144 = scmp.eq.s32.totalorder %s17, 0
      %p145 = por %p143, %p144
      %p146 = scmp.ne.s32.totalorder %s135, %s138
      %p147 = scmp.eq.s32.totalorder %s22, 3
      %p148 = por %p146, %p147
      %p149 = scmp.ne.s32.totalorder %s138, %s139
      %p150 = scmp.eq.s32.totalorder %s22, 0
      %p151 = por %p149, %p150
      %p152 = scmp.ne.s32.totalorder %s138, %s139
      %p153 = scmp.eq.s32.totalorder %s23, 3
      %p154 = por %p152, %p153
      %p156 = scmp.ne.s32.totalorder %s139, %s155
      %p157 = scmp.eq.s32.totalorder %s23, 0
      %p158 = por %p156, %p157
      %p159 = scmp.le.s32.totalorder 1, %s17
      %p160 = scmp.lt.s32.totalorder %s17, 5
      %p161 = pnand %p159, %p160
      %p162 = pneg %p161
      // Predicated region
      $region9: #{tpu_custom_call.1} parent=5 // pred_check
        _
      $region10: #{tpu_custom_call.1} parent=5 // pred_check_branch
        %164 = sbr.rel (%p161) target = $region12
      $region11: #{tpu_custom_call.1} parent=5 // pred_region
        %s165 = ssub.s32 %s17, 1
        // Predicated region
        $region13: #{tpu_custom_call.1} parent=11 // pred_check
          %p166 = pneg %p76
        $region14: #{tpu_custom_call.1} parent=11 // pred_check_branch
          %168 = sbr.rel (%p166) target = $region16
        $region15: #{tpu_custom_call.1} parent=11 // pred_region
          %s170 = ssub.s32 256, 256
          %171 = vsyncadd [#allocation7], %s170
          %s172 = sshll.u32 [#allocation6], 4
          %s173 = int_to_ptr.vmem [resolvable:$true] %s172
          %178 = dma.hbm_to_vmem [thread:$0]  %s1, 256, %s173, [#allocation7], 128, 128, 8
        $region16: #{tpu_custom_call.1} parent=11 // pred_fallthru
          _
        // Predicated region
        $region17: #{tpu_custom_call.1} parent=11 // pred_check
          %p179 = pneg %p97
        $region18: #{tpu_custom_call.1} parent=11 // pred_check_branch
          %181 = sbr.rel (%p179) target = $region20
        $region19: #{tpu_custom_call.1} parent=11 // pred_region
          _
        $region20: #{tpu_custom_call.1} parent=11 // pred_fallthru
          _
      $region12: #{tpu_custom_call.1} parent=5 // pred_fallthru
        _
      %p182 = scmp.lt.s32.totalorder %s17, 4
      // Predicated region
      $region21: #{tpu_custom_call.1} parent=5 // pred_check
        %p183 = pneg %p182
      $region22: #{tpu_custom_call.1} parent=5 // pred_check_branch
        %185 = sbr.rel (%p183) target = $region24
      $region23: #{tpu_custom_call.1} parent=5 // pred_region
        // Predicated region
        $region25: #{tpu_custom_call.1} parent=23 // pred_check
          %p186 = pneg %p49
        $region26: #{tpu_custom_call.1} parent=23 // pred_check_branch
          %188 = sbr.rel (%p186) target = $region28
        $region27: #{tpu_custom_call.1} parent=23 // pred_region
          %s189 = sand.u32 %s17, 1
          %s190 = scalar_lea.sflag [#allocation4], %s189
          %s191 = sand.u32 %s39, 1
          %s192 = smul.addr %s191, 512
          %s193 = scalar_lea.vmem [#allocation3], %s192
          %s194 = smul.u32 4, %s24
          %s196 = ssub.s32 8192, 8192
          %197 = vsyncadd %s190, %s196
          %s198 = smul.addr %s194, 32
          %s199 = smul.addr %s198, 64
          %s200 = scalar_lea.hbm %s0, %s199
          %s201 = sshll.u32 %s193, 4
          %s202 = int_to_ptr.vmem [resolvable:$true] %s201
          %207 = dma.hbm_to_vmem [thread:$0]  %s200, 8192, %s202, %s190, 64, 64, 4
        $region28: #{tpu_custom_call.1} parent=23 // pred_fallthru
          _
        // Predicated region
        $region29: #{tpu_custom_call.1} parent=23 // pred_check
          %p208 = pneg %p117
        $region30: #{tpu_custom_call.1} parent=23 // pred_check_branch
          %210 = sbr.rel (%p208) target = $region32
        $region31: #{tpu_custom_call.1} parent=23 // pred_region
          %s211 = sand.u32 %s17, 1
          %s212 = scalar_lea.sflag [#allocation4], %s211
          %s213 = sand.u32 %s107, 1
          %s214 = smul.addr %s213, 64
          %s215 = scalar_lea.vmem [#allocation8], %s214
          %s217 = ssub.s32 1024, 1024
          %218 = vsyncadd %s212, %s217
          %s219 = smul.addr %s25, 64
          %s220 = scalar_lea.hbm %s3, %s219
          %s221 = sshll.u32 %s215, 4
          %s222 = int_to_ptr.vmem [resolvable:$true] %s221
          %227 = dma.hbm_to_vmem [thread:$0]  %s220, 1024, %s222, %s212, 128, 64, 4
        $region32: #{tpu_custom_call.1} parent=23 // pred_fallthru
          _
      $region24: #{tpu_custom_call.1} parent=5 // pred_fallthru
        _
      %p228 = scmp.le.s32.totalorder 1, %s17
      %p229 = scmp.lt.s32.totalorder %s17, 5
      %p230 = pnand %p228, %p229
      %p231 = pneg %p230
      // Predicated region
      $region33: #{tpu_custom_call.1} parent=5 // pred_check
        _
      $region34: #{tpu_custom_call.1} parent=5 // pred_check_branch
        %233 = sbr.rel (%p230) target = $region36
      $region35: #{tpu_custom_call.1} parent=5 // pred_region
        %s234 = ssub.s32 %s17, 1
        %s235 = sand.u32 %s22, 1
        %s236 = scalar_lea.sflag [#allocation4], %s235
        %s237 = sand.u32 %s42, 1
        %s238 = smul.addr %s237, 512
        %s239 = scalar_lea.vmem [#allocation3], %s238
        // Predicated region
        $region37: #{tpu_custom_call.1} parent=35 // pred_check
          %p240 = pneg %p55
        $region38: #{tpu_custom_call.1} parent=35 // pred_check_branch
          %242 = sbr.rel (%p240) target = $region40
        $region39: #{tpu_custom_call.1} parent=35 // pred_region
          %243 = dma.done %s236, 8192
        $region40: #{tpu_custom_call.1} parent=35 // pred_fallthru
          _
        // Predicated region
        $region41: #{tpu_custom_call.1} parent=35 // pred_check
          %p244 = pneg %p76
        $region42: #{tpu_custom_call.1} parent=35 // pred_check_branch
          %246 = sbr.rel (%p244) target = $region44
        $region43: #{tpu_custom_call.1} parent=35 // pred_region
          %247 = dma.done [#allocation7], 256
        $region44: #{tpu_custom_call.1} parent=35 // pred_fallthru
          _
        %s248 = sand.u32 %s22, 1
        %s249 = scalar_lea.sflag [#allocation4], %s248
        %s250 = sand.u32 %s110, 1
        %s251 = smul.addr %s250, 64
        %s252 = scalar_lea.vmem [#allocation8], %s251
        // Predicated region
        $region45: #{tpu_custom_call.1} parent=35 // pred_check
          %p253 = pneg %p123
        $region46: #{tpu_custom_call.1} parent=35 // pred_check_branch
          %255 = sbr.rel (%p253) target = $region48
        $region47: #{tpu_custom_call.1} parent=35 // pred_region
          %256 = dma.done %s249, 1024
        $region48: #{tpu_custom_call.1} parent=35 // pred_fallthru
          _
        %s257 = sand.u32 %s22, 1
        %s258 = scalar_lea.sflag [#allocation4], %s257
        %s259 = sand.u32 %s42, 1
        %s260 = smul.addr %s259, 512
        %s261 = scalar_lea.vmem [#allocation3], %s260
        %p262 = pneg %p55
        %p263 = pneg %p52
        %p264 = pneg %p76
        %p265 = pneg %p73
        %p266 = pneg %p97
        %p267 = pneg %p94
        %s268 = sand.u32 %s22, 1
        %s269 = scalar_lea.sflag [#allocation4], %s268
        %s270 = sand.u32 %s110, 1
        %s271 = smul.addr %s270, 64
        %s272 = scalar_lea.vmem [#allocation8], %s271
        %p273 = pneg %p123
        %p274 = pneg %p120
        %p275 = pneg %p151
        %p276 = pneg %p148
        %s277 = sand.u32 %s138, 1
        %s278 = scalar_lea.sflag [#allocation5], %s277
        %s279 = sand.u32 %s138, 1
        %s280 = smul.addr %s279, 32
        %s281 = scalar_lea.vmem [#allocation9], %s280
        %s282 = smul.u32 4, %s26
        %s283 = smul.u32 4, %s26
        %p285 = scmp.eq.s32.totalorder %s27, 0
        // Predicated region
        $region49: #{tpu_custom_call.1} parent=35 // pred_check
          %p286 = pneg %p285
        $region50: #{tpu_custom_call.1} parent=35 // pred_check_branch
          %288 = sbr.rel (%p286) target = $region52
        $region51: #{tpu_custom_call.1} parent=35 // pred_region
          %v289 = vld [vmem:[#allocation6] sm:$0xff]
          %v290 = vld [vmem:[#allocation6 + $0x8] sm:$0xff]
          %v291 = vld [vmem:[%s2] sm:$0x1]
          %v292 = vld [vmem:[%s239] sm:$0xf]
          %v293 = vld [vmem:[%s239 + $0x4] sm:$0xf]
          %v294 = vld [vmem:[%s239 + $0x8] sm:$0xf]
          %v295 = vld [vmem:[%s239 + $0xc] sm:$0xf]
          %v296 = vld [vmem:[%s239 + $0x10] sm:$0xf]
          %v297 = vld [vmem:[%s239 + $0x14] sm:$0xf]
          %v298 = vld [vmem:[%s239 + $0x18] sm:$0xf]
          %v299 = vld [vmem:[%s239 + $0x1c] sm:$0xf]
          %v300 = vld [vmem:[%s239 + $0x20] sm:$0xf]
          %v301 = vld [vmem:[%s239 + $0x24] sm:$0xf]
          %v302 = vld [vmem:[%s239 + $0x28] sm:$0xf]
          %v303 = vld [vmem:[%s239 + $0x2c] sm:$0xf]
          %v304 = vld [vmem:[%s239 + $0x30] sm:$0xf]
          %v305 = vld [vmem:[%s239 + $0x34] sm:$0xf]
          %v306 = vld [vmem:[%s239 + $0x38] sm:$0xf]
          %v307 = vld [vmem:[%s239 + $0x3c] sm:$0xf]
          %v308 = vld [vmem:[%s239 + $0x40] sm:$0xf]
          %v309 = vld [vmem:[%s239 + $0x44] sm:$0xf]
          %v310 = vld [vmem:[%s239 + $0x48] sm:$0xf]
          %v311 = vld [vmem:[%s239 + $0x4c] sm:$0xf]
          %v312 = vld [vmem:[%s239 + $0x50] sm:$0xf]
          %v313 = vld [vmem:[%s239 + $0x54] sm:$0xf]
          %v314 = vld [vmem:[%s239 + $0x58] sm:$0xf]
          %v315 = vld [vmem:[%s239 + $0x5c] sm:$0xf]
          %v316 = vld [vmem:[%s239 + $0x60] sm:$0xf]
          %v317 = vld [vmem:[%s239 + $0x64] sm:$0xf]
          %v318 = vld [vmem:[%s239 + $0x68] sm:$0xf]
          %v319 = vld [vmem:[%s239 + $0x6c] sm:$0xf]
          %v320 = vld [vmem:[%s239 + $0x70] sm:$0xf]
          %v321 = vld [vmem:[%s239 + $0x74] sm:$0xf]
          %v322 = vld [vmem:[%s239 + $0x78] sm:$0xf]
          %v323 = vld [vmem:[%s239 + $0x7c] sm:$0xf]
          %v326 = vunpack.c.l.b16 %v289
          %v327 = vunpack.c.h.b16 %v289
          %v328 = vunpack.c.l.b16 %v290
          %v329 = vunpack.c.h.b16 %v290
          %v330 = vpack.c.b16 %v328, %v326
          %v331 = vpack.c.b16 %v329, %v327
          %v366 = vunpack.c.l.b16 %v292
          %v367 = vunpack.c.l.b16 %v293
          %v368 = vunpack.c.l.b16 %v294
          %v369 = vunpack.c.l.b16 %v295
          %v370 = vunpack.c.l.b16 %v296
          %v371 = vunpack.c.l.b16 %v297
          %v372 = vunpack.c.l.b16 %v298
          %v373 = vunpack.c.l.b16 %v299
          %v374 = vunpack.c.l.b16 %v300
          %v375 = vunpack.c.l.b16 %v301
          %v376 = vunpack.c.l.b16 %v302
          %v377 = vunpack.c.l.b16 %v303
          %v378 = vunpack.c.l.b16 %v304
          %v379 = vunpack.c.l.b16 %v305
          %v380 = vunpack.c.l.b16 %v306
          %v381 = vunpack.c.l.b16 %v307
          %v382 = vunpack.c.l.b16 %v308
          %v383 = vunpack.c.l.b16 %v309
          %v384 = vunpack.c.l.b16 %v310
          %v385 = vunpack.c.l.b16 %v311
          %v386 = vunpack.c.l.b16 %v312
          %v387 = vunpack.c.l.b16 %v313
          %v388 = vunpack.c.l.b16 %v314
          %v389 = vunpack.c.l.b16 %v315
          %v390 = vunpack.c.l.b16 %v316
          %v391 = vunpack.c.l.b16 %v317
          %v392 = vunpack.c.l.b16 %v318
          %v393 = vunpack.c.l.b16 %v319
          %v394 = vunpack.c.l.b16 %v320
          %v395 = vunpack.c.l.b16 %v321
          %v396 = vunpack.c.l.b16 %v322
          %v397 = vunpack.c.l.b16 %v323
          %v398 = vpack.c.b16 %v367, %v366
          %v399 = vpack.c.b16 %v369, %v368
          %v400 = vpack.c.b16 %v371, %v370
          %v401 = vpack.c.b16 %v373, %v372
          %v402 = vpack.c.b16 %v375, %v374
          %v403 = vpack.c.b16 %v377, %v376
          %v404 = vpack.c.b16 %v379, %v378
          %v405 = vpack.c.b16 %v381, %v380
          %v406 = vpack.c.b16 %v383, %v382
          %v407 = vpack.c.b16 %v385, %v384
          %v408 = vpack.c.b16 %v387, %v386
          %v409 = vpack.c.b16 %v389, %v388
          %v410 = vpack.c.b16 %v391, %v390
          %v411 = vpack.c.b16 %v393, %v392
          %v412 = vpack.c.b16 %v395, %v394
          %v413 = vpack.c.b16 %v397, %v396
          %430 = vmatprep.subr.bf16.mxu0 0
          %431 = vmatpush1.bf16.msra.mxu0 %v398
          %432 = vmatprep.subr.bf16.mxu0 0
          %433 = vmatpush1.bf16.msra.mxu0 %v399
          %434 = vmatprep.subr.bf16.mxu0 0
          %435 = vmatpush1.bf16.msra.mxu0 %v400
          %436 = vmatprep.subr.bf16.mxu0 0
          %437 = vmatpush1.bf16.msra.mxu0 %v401
          %438 = vmatprep.subr.bf16.mxu0 0
          %439 = vmatpush1.bf16.msra.mxu0 %v402
          %440 = vmatprep.subr.bf16.mxu0 0
          %441 = vmatpush1.bf16.msra.mxu0 %v403
          %442 = vmatprep.subr.bf16.mxu0 0
          %443 = vmatpush1.bf16.msra.mxu0 %v404
          %444 = vmatprep.subr.bf16.mxu0 0
          %445 = vmatpush1.bf16.msra.mxu0 %v405
          %446 = vmatprep.subr.bf16.mxu0 0
          %447 = vmatpush1.bf16.msra.mxu0 %v406
          %448 = vmatprep.subr.bf16.mxu0 0
          %449 = vmatpush1.bf16.msra.mxu0 %v407
          %450 = vmatprep.subr.bf16.mxu0 0
          %451 = vmatpush1.bf16.msra.mxu0 %v408
          %452 = vmatprep.subr.bf16.mxu0 0
          %453 = vmatpush1.bf16.msra.mxu0 %v409
          %454 = vmatprep.subr.bf16.mxu0 0
          %455 = vmatpush1.bf16.msra.mxu0 %v410
          %456 = vmatprep.subr.bf16.mxu0 0
          %457 = vmatpush1.bf16.msra.mxu0 %v411
          %458 = vmatprep.subr.bf16.mxu0 0
          %459 = vmatpush1.bf16.msra.mxu0 %v412
          %460 = vmatprep.subr.bf16.mxu0 0
          %461 = vmatpush1.bf16.msra.mxu0 %v413
          %462 = vmatprep.mubr.bf16.mxu0 %v331
          %463 = vmatmul.mubr.bf16.gmra.mrb[0].mxu0 %v330
          %v464 = vpop.f32.mrb[0].mxu0
          %v465 = vadd.f32 0.0, %v464
          %v466 = vpop.f32.mrb[0].mxu0
          %v467 = vpop.f32.mrb[0].mxu0
          %v468 = vadd.f32 0.0, %v467
          %v469 = vpop.f32.mrb[0].mxu0
          %470 = vdwg.mxu0
          %v471 = vpack.c.bf16 %v468, %v465
          %v472 = vunpack.c.l.bf16 %v471
          %v473 = vunpack.c.h.bf16 %v471
          %v474 = vmul.f32 %v472, %v472
          %v475 = vmul.f32 %v473, %v473
          %476 = vadd.xlane.f32.xlu0 %v474
          %v477 = vpop.xlane.xlu0 %476
          %478 = vadd.xlane.f32.xlu0 %v475
          %v479 = vpop.xlane.xlu0 %478
          %v480 = vrcp.pop 128.0
          %v481 = vmul.f32 %v477, %v480
          %v482 = vmul.f32 %v479, %v480
          %v483 = vadd.f32 %v481, 1e-06
          %v484 = vadd.f32 %v482, 1e-06
          %v485 = vrsqrt.pop %v483
          %v486 = vrsqrt.pop %v484
          %v487 = vmul.f32 %v472, %v485
          %v488 = vmul.f32 %v473, %v486
          %v490 = vlaneseq
          %v491 = vshrl.u32 %v490, 7
          %v492 = vsub.s32 0, %v491
          %v493 = vrot.slane %v291, %v492
          %v495 = vmul.f32 %v487, %v493
          %v496 = vmul.f32 %v488, %v493
          %v497 = vpack.c.bf16 %v496, %v495
          %498 = vst [vmem:[#allocation2] sm:$0xff] %v497
          %s499 = scalar_lea.vmem %s239, 128 [#allocation3]
          %v500 = vld [vmem:[%s499] sm:$0xf]
          %v501 = vld [vmem:[%s499 + $0x4] sm:$0xf]
          %v502 = vld [vmem:[%s499 + $0x8] sm:$0xf]
          %v503 = vld [vmem:[%s499 + $0xc] sm:$0xf]
          %v504 = vld [vmem:[%s499 + $0x10] sm:$0xf]
          %v505 = vld [vmem:[%s499 + $0x14] sm:$0xf]
          %v506 = vld [vmem:[%s499 + $0x18] sm:$0xf]
          %v507 = vld [vmem:[%s499 + $0x1c] sm:$0xf]
          %v508 = vld [vmem:[%s499 + $0x20] sm:$0xf]
          %v509 = vld [vmem:[%s499 + $0x24] sm:$0xf]
          %v510 = vld [vmem:[%s499 + $0x28] sm:$0xf]
          %v511 = vld [vmem:[%s499 + $0x2c] sm:$0xf]
          %v512 = vld [vmem:[%s499 + $0x30] sm:$0xf]
          %v513 = vld [vmem:[%s499 + $0x34] sm:$0xf]
          %v514 = vld [vmem:[%s499 + $0x38] sm:$0xf]
          %v515 = vld [vmem:[%s499 + $0x3c] sm:$0xf]
          %v516 = vld [vmem:[%s499 + $0x40] sm:$0xf]
          %v517 = vld [vmem:[%s499 + $0x44] sm:$0xf]
          %v518 = vld [vmem:[%s499 + $0x48] sm:$0xf]
          %v519 = vld [vmem:[%s499 + $0x4c] sm:$0xf]
          %v520 = vld [vmem:[%s499 + $0x50] sm:$0xf]
          %v521 = vld [vmem:[%s499 + $0x54] sm:$0xf]
          %v522 = vld [vmem:[%s499 + $0x58] sm:$0xf]
          %v523 = vld [vmem:[%s499 + $0x5c] sm:$0xf]
          %v524 = vld [vmem:[%s499 + $0x60] sm:$0xf]
          %v525 = vld [vmem:[%s499 + $0x64] sm:$0xf]
          %v526 = vld [vmem:[%s499 + $0x68] sm:$0xf]
          %v527 = vld [vmem:[%s499 + $0x6c] sm:$0xf]
          %v528 = vld [vmem:[%s499 + $0x70] sm:$0xf]
          %v529 = vld [vmem:[%s499 + $0x74] sm:$0xf]
          %v530 = vld [vmem:[%s499 + $0x78] sm:$0xf]
          %v531 = vld [vmem:[%s499 + $0x7c] sm:$0xf]
          %v564 = vunpack.c.l.b16 %v500
          %v565 = vunpack.c.l.b16 %v501
          %v566 = vunpack.c.l.b16 %v502
          %v567 = vunpack.c.l.b16 %v503
          %v568 = vunpack.c.l.b16 %v504
          %v569 = vunpack.c.l.b16 %v505
          %v570 = vunpack.c.l.b16 %v506
          %v571 = vunpack.c.l.b16 %v507
          %v572 = vunpack.c.l.b16 %v508
          %v573 = vunpack.c.l.b16 %v509
          %v574 = vunpack.c.l.b16 %v510
          %v575 = vunpack.c.l.b16 %v511
          %v576 = vunpack.c.l.b16 %v512
          %v577 = vunpack.c.l.b16 %v513
          %v578 = vunpack.c.l.b16 %v514
          %v579 = vunpack.c.l.b16 %v515
          %v580 = vunpack.c.l.b16 %v516
          %v581 = vunpack.c.l.b16 %v517
          %v582 = vunpack.c.l.b16 %v518
          %v583 = vunpack.c.l.b16 %v519
          %v584 = vunpack.c.l.b16 %v520
          %v585 = vunpack.c.l.b16 %v521
          %v586 = vunpack.c.l.b16 %v522
          %v587 = vunpack.c.l.b16 %v523
          %v588 = vunpack.c.l.b16 %v524
          %v589 = vunpack.c.l.b16 %v525
          %v590 = vunpack.c.l.b16 %v526
          %v591 = vunpack.c.l.b16 %v527
          %v592 = vunpack.c.l.b16 %v528
          %v593 = vunpack.c.l.b16 %v529
          %v594 = vunpack.c.l.b16 %v530
          %v595 = vunpack.c.l.b16 %v531
          %v596 = vpack.c.b16 %v565, %v564
          %v597 = vpack.c.b16 %v567, %v566
          %v598 = vpack.c.b16 %v569, %v568
          %v599 = vpack.c.b16 %v571, %v570
          %v600 = vpack.c.b16 %v573, %v572
          %v601 = vpack.c.b16 %v575, %v574
          %v602 = vpack.c.b16 %v577, %v576
          %v603 = vpack.c.b16 %v579, %v578
          %v604 = vpack.c.b16 %v581, %v580
          %v605 = vpack.c.b16 %v583, %v582
          %v606 = vpack.c.b16 %v585, %v584
          %v607 = vpack.c.b16 %v587, %v586
          %v608 = vpack.c.b16 %v589, %v588
          %v609 = vpack.c.b16 %v591, %v590
          %v610 = vpack.c.b16 %v593, %v592
          %v611 = vpack.c.b16 %v595, %v594
          %628 = vmatprep.subr.bf16.mxu0 0
          %629 = vmatpush1.bf16.msra.mxu0 %v596
          %630 = vmatprep.subr.bf16.mxu0 0
          %631 = vmatpush1.bf16.msra.mxu0 %v597
          %632 = vmatprep.subr.bf16.mxu0 0
          %633 = vmatpush1.bf16.msra.mxu0 %v598
          %634 = vmatprep.subr.bf16.mxu0 0
          %635 = vmatpush1.bf16.msra.mxu0 %v599
          %636 = vmatprep.subr.bf16.mxu0 0
          %637 = vmatpush1.bf16.msra.mxu0 %v600
          %638 = vmatprep.subr.bf16.mxu0 0
          %639 = vmatpush1.bf16.msra.mxu0 %v601
          %640 = vmatprep.subr.bf16.mxu0 0
          %641 = vmatpush1.bf16.msra.mxu0 %v602
          %642 = vmatprep.subr.bf16.mxu0 0
          %643 = vmatpush1.bf16.msra.mxu0 %v603
          %644 = vmatprep.subr.bf16.mxu0 0
          %645 = vmatpush1.bf16.msra.mxu0 %v604
          %646 = vmatprep.subr.bf16.mxu0 0
          %647 = vmatpush1.bf16.msra.mxu0 %v605
          %648 = vmatprep.subr.bf16.mxu0 0
          %649 = vmatpush1.bf16.msra.mxu0 %v606
          %650 = vmatprep.subr.bf16.mxu0 0
          %651 = vmatpush1.bf16.msra.mxu0 %v607
          %652 = vmatprep.subr.bf16.mxu0 0
          %653 = vmatpush1.bf16.msra.mxu0 %v608
          %654 = vmatprep.subr.bf16.mxu0 0
          %655 = vmatpush1.bf16.msra.mxu0 %v609
          %656 = vmatprep.subr.bf16.mxu0 0
          %657 = vmatpush1.bf16.msra.mxu0 %v610
          %658 = vmatprep.subr.bf16.mxu0 0
          %659 = vmatpush1.bf16.msra.mxu0 %v611
          %660 = vmatprep.mubr.bf16.mxu0 %v331
          %661 = vmatmul.mubr.bf16.gmra.mrb[0].mxu0 %v330
          %v662 = vpop.f32.mrb[0].mxu0
          %v663 = vadd.f32 0.0, %v662
          %v664 = vpop.f32.mrb[0].mxu0
          %v665 = vpop.f32.mrb[0].mxu0
          %v666 = vadd.f32 0.0, %v665
          %v667 = vpop.f32.mrb[0].mxu0
          %668 = vdwg.mxu0
          %v669 = vpack.c.bf16 %v666, %v663
          %v670 = vunpack.c.l.bf16 %v669
          %v671 = vunpack.c.h.bf16 %v669
          %v672 = vmul.f32 %v670, %v670
          %v673 = vmul.f32 %v671, %v671
          %674 = vadd.xlane.f32.xlu0 %v672
          %v675 = vpop.xlane.xlu0 %674
          %676 = vadd.xlane.f32.xlu0 %v673
          %v677 = vpop.xlane.xlu0 %676
          %v678 = vmul.f32 %v675, %v480
          %v679 = vmul.f32 %v677, %v480
          %v680 = vadd.f32 %v678, 1e-06
          %v681 = vadd.f32 %v679, 1e-06
          %v682 = vrsqrt.pop %v680
          %v683 = vrsqrt.pop %v681
          %v684 = vmul.f32 %v670, %v682
          %v685 = vmul.f32 %v671, %v683
          %v686 = vmul.f32 %v684, %v493
          %v687 = vmul.f32 %v685, %v493
          %v688 = vpack.c.bf16 %v687, %v686
          %689 = vst [vmem:[#allocation2 + $0x8] sm:$0xff] %v688
          %s690 = scalar_lea.vmem %s239, 256 [#allocation3]
          %v691 = vld [vmem:[%s690] sm:$0xf]
          %v692 = vld [vmem:[%s690 + $0x4] sm:$0xf]
          %v693 = vld [vmem:[%s690 + $0x8] sm:$0xf]
          %v694 = vld [vmem:[%s690 + $0xc] sm:$0xf]
          %v695 = vld [vmem:[%s690 + $0x10] sm:$0xf]
          %v696 = vld [vmem:[%s690 + $0x14] sm:$0xf]
          %v697 = vld [vmem:[%s690 + $0x18] sm:$0xf]
          %v698 = vld [vmem:[%s690 + $0x1c] sm:$0xf]
          %v699 = vld [vmem:[%s690 + $0x20] sm:$0xf]
          %v700 = vld [vmem:[%s690 + $0x24] sm:$0xf]
          %v701 = vld [vmem:[%s690 + $0x28] sm:$0xf]
          %v702 = vld [vmem:[%s690 + $0x2c] sm:$0xf]
          %v703 = vld [vmem:[%s690 + $0x30] sm:$0xf]
          %v704 = vld [vmem:[%s690 + $0x34] sm:$0xf]
          %v705 = vld [vmem:[%s690 + $0x38] sm:$0xf]
          %v706 = vld [vmem:[%s690 + $0x3c] sm:$0xf]
          %v707 = vld [vmem:[%s690 + $0x40] sm:$0xf]
          %v708 = vld [vmem:[%s690 + $0x44] sm:$0xf]
          %v709 = vld [vmem:[%s690 + $0x48] sm:$0xf]
          %v710 = vld [vmem:[%s690 + $0x4c] sm:$0xf]
          %v711 = vld [vmem:[%s690 + $0x50] sm:$0xf]
          %v712 = vld [vmem:[%s690 + $0x54] sm:$0xf]
          %v713 = vld [vmem:[%s690 + $0x58] sm:$0xf]
          %v714 = vld [vmem:[%s690 + $0x5c] sm:$0xf]
          %v715 = vld [vmem:[%s690 + $0x60] sm:$0xf]
          %v716 = vld [vmem:[%s690 + $0x64] sm:$0xf]
          %v717 = vld [vmem:[%s690 + $0x68] sm:$0xf]
          %v718 = vld [vmem:[%s690 + $0x6c] sm:$0xf]
          %v719 = vld [vmem:[%s690 + $0x70] sm:$0xf]
          %v720 = vld [vmem:[%s690 + $0x74] sm:$0xf]
          %v721 = vld [vmem:[%s690 + $0x78] sm:$0xf]
          %v722 = vld [vmem:[%s690 + $0x7c] sm:$0xf]
          %v755 = vunpack.c.l.b16 %v691
          %v756 = vunpack.c.l.b16 %v692
          %v757 = vunpack.c.l.b16 %v693
          %v758 = vunpack.c.l.b16 %v694
          %v759 = vunpack.c.l.b16 %v695
          %v760 = vunpack.c.l.b16 %v696
          %v761 = vunpack.c.l.b16 %v697
          %v762 = vunpack.c.l.b16 %v698
          %v763 = vunpack.c.l.b16 %v699
          %v764 = vunpack.c.l.b16 %v700
          %v765 = vunpack.c.l.b16 %v701
          %v766 = vunpack.c.l.b16 %v702
          %v767 = vunpack.c.l.b16 %v703
          %v768 = vunpack.c.l.b16 %v704
          %v769 = vunpack.c.l.b16 %v705
          %v770 = vunpack.c.l.b16 %v706
          %v771 = vunpack.c.l.b16 %v707
          %v772 = vunpack.c.l.b16 %v708
          %v773 = vunpack.c.l.b16 %v709
          %v774 = vunpack.c.l.b16 %v710
          %v775 = vunpack.c.l.b16 %v711
          %v776 = vunpack.c.l.b16 %v712
          %v777 = vunpack.c.l.b16 %v713
          %v778 = vunpack.c.l.b16 %v714
          %v779 = vunpack.c.l.b16 %v715
          %v780 = vunpack.c.l.b16 %v716
          %v781 = vunpack.c.l.b16 %v717
          %v782 = vunpack.c.l.b16 %v718
          %v783 = vunpack.c.l.b16 %v719
          %v784 = vunpack.c.l.b16 %v720
          %v785 = vunpack.c.l.b16 %v721
          %v786 = vunpack.c.l.b16 %v722
          %v787 = vpack.c.b16 %v756, %v755
          %v788 = vpack.c.b16 %v758, %v757
          %v789 = vpack.c.b16 %v760, %v759
          %v790 = vpack.c.b16 %v762, %v761
          %v791 = vpack.c.b16 %v764, %v763
          %v792 = vpack.c.b16 %v766, %v765
          %v793 = vpack.c.b16 %v768, %v767
          %v794 = vpack.c.b16 %v770, %v769
          %v795 = vpack.c.b16 %v772, %v771
          %v796 = vpack.c.b16 %v774, %v773
          %v797 = vpack.c.b16 %v776, %v775
          %v798 = vpack.c.b16 %v778, %v777
          %v799 = vpack.c.b16 %v780, %v779
          %v800 = vpack.c.b16 %v782, %v781
          %v801 = vpack.c.b16 %v784, %v783
          %v802 = vpack.c.b16 %v786, %v785
          %819 = vmatprep.subr.bf16.mxu0 0
          %820 = vmatpush1.bf16.msra.mxu0 %v787
          %821 = vmatprep.subr.bf16.mxu0 0
          %822 = vmatpush1.bf16.msra.mxu0 %v788
          %823 = vmatprep.subr.bf16.mxu0 0
          %824 = vmatpush1.bf16.msra.mxu0 %v789
          %825 = vmatprep.subr.bf16.mxu0 0
          %826 = vmatpush1.bf16.msra.mxu0 %v790
          %827 = vmatprep.subr.bf16.mxu0 0
          %828 = vmatpush1.bf16.msra.mxu0 %v791
          %829 = vmatprep.subr.bf16.mxu0 0
          %830 = vmatpush1.bf16.msra.mxu0 %v792
          %831 = vmatprep.subr.bf16.mxu0 0
          %832 = vmatpush1.bf16.msra.mxu0 %v793
          %833 = vmatprep.subr.bf16.mxu0 0
          %834 = vmatpush1.bf16.msra.mxu0 %v794
          %835 = vmatprep.subr.bf16.mxu0 0
          %836 = vmatpush1.bf16.msra.mxu0 %v795
          %837 = vmatprep.subr.bf16.mxu0 0
          %838 = vmatpush1.bf16.msra.mxu0 %v796
          %839 = vmatprep.subr.bf16.mxu0 0
          %840 = vmatpush1.bf16.msra.mxu0 %v797
          %841 = vmatprep.subr.bf16.mxu0 0
          %842 = vmatpush1.bf16.msra.mxu0 %v798
          %843 = vmatprep.subr.bf16.mxu0 0
          %844 = vmatpush1.bf16.msra.mxu0 %v799
          %845 = vmatprep.subr.bf16.mxu0 0
          %846 = vmatpush1.bf16.msra.mxu0 %v800
          %847 = vmatprep.subr.bf16.mxu0 0
          %848 = vmatpush1.bf16.msra.mxu0 %v801
          %849 = vmatprep.subr.bf16.mxu0 0
          %850 = vmatpush1.bf16.msra.mxu0 %v802
          %851 = vmatprep.mubr.bf16.mxu0 %v331
          %852 = vmatmul.mubr.bf16.gmra.mrb[0].mxu0 %v330
          %v853 = vpop.f32.mrb[0].mxu0
          %v854 = vadd.f32 0.0, %v853
          %v855 = vpop.f32.mrb[0].mxu0
          %v856 = vpop.f32.mrb[0].mxu0
          %v857 = vadd.f32 0.0, %v856
          %v858 = vpop.f32.mrb[0].mxu0
          %859 = vdwg.mxu0
          %v860 = vpack.c.bf16 %v857, %v854
          %v861 = vunpack.c.l.bf16 %v860
          %v862 = vunpack.c.h.bf16 %v860
          %v863 = vmul.f32 %v861, %v861
          %v864 = vmul.f32 %v862, %v862
          %865 = vadd.xlane.f32.xlu0 %v863
          %v866 = vpop.xlane.xlu0 %865
          %867 = vadd.xlane.f32.xlu0 %v864
          %v868 = vpop.xlane.xlu0 %867
          %v869 = vmul.f32 %v866, %v480
          %v870 = vmul.f32 %v868, %v480
          %v871 = vadd.f32 %v869, 1e-06
          %v872 = vadd.f32 %v870, 1e-06
          %v873 = vrsqrt.pop %v871
          %v874 = vrsqrt.pop %v872
          %v875 = vmul.f32 %v861, %v873
          %v876 = vmul.f32 %v862, %v874
          %v877 = vmul.f32 %v875, %v493
          %v878 = vmul.f32 %v876, %v493
          %v879 = vpack.c.bf16 %v878, %v877
          %880 = vst [vmem:[#allocation2 + $0x10] sm:$0xff] %v879
          %s881 = scalar_lea.vmem %s239, 384 [#allocation3]
          %v882 = vld [vmem:[%s881] sm:$0xf]
          %v883 = vld [vmem:[%s881 + $0x4] sm:$0xf]
          %v884 = vld [vmem:[%s881 + $0x8] sm:$0xf]
          %v885 = vld [vmem:[%s881 + $0xc] sm:$0xf]
          %v886 = vld [vmem:[%s881 + $0x10] sm:$0xf]
          %v887 = vld [vmem:[%s881 + $0x14] sm:$0xf]
          %v888 = vld [vmem:[%s881 + $0x18] sm:$0xf]
          %v889 = vld [vmem:[%s881 + $0x1c] sm:$0xf]
          %v890 = vld [vmem:[%s881 + $0x20] sm:$0xf]
          %v891 = vld [vmem:[%s881 + $0x24] sm:$0xf]
          %v892 = vld [vmem:[%s881 + $0x28] sm:$0xf]
          %v893 = vld [vmem:[%s881 + $0x2c] sm:$0xf]
          %v894 = vld [vmem:[%s881 + $0x30] sm:$0xf]
          %v895 = vld [vmem:[%s881 + $0x34] sm:$0xf]
          %v896 = vld [vmem:[%s881 + $0x38] sm:$0xf]
          %v897 = vld [vmem:[%s881 + $0x3c] sm:$0xf]
          %v898 = vld [vmem:[%s881 + $0x40] sm:$0xf]
          %v899 = vld [vmem:[%s881 + $0x44] sm:$0xf]
          %v900 = vld [vmem:[%s881 + $0x48] sm:$0xf]
          %v901 = vld [vmem:[%s881 + $0x4c] sm:$0xf]
          %v902 = vld [vmem:[%s881 + $0x50] sm:$0xf]
          %v903 = vld [vmem:[%s881 + $0x54] sm:$0xf]
          %v904 = vld [vmem:[%s881 + $0x58] sm:$0xf]
          %v905 = vld [vmem:[%s881 + $0x5c] sm:$0xf]
          %v906 = vld [vmem:[%s881 + $0x60] sm:$0xf]
          %v907 = vld [vmem:[%s881 + $0x64] sm:$0xf]
          %v908 = vld [vmem:[%s881 + $0x68] sm:$0xf]
          %v909 = vld [vmem:[%s881 + $0x6c] sm:$0xf]
          %v910 = vld [vmem:[%s881 + $0x70] sm:$0xf]
          %v911 = vld [vmem:[%s881 + $0x74] sm:$0xf]
          %v912 = vld [vmem:[%s881 + $0x78] sm:$0xf]
          %v913 = vld [vmem:[%s881 + $0x7c] sm:$0xf]
          %v946 = vunpack.c.l.b16 %v882
          %v947 = vunpack.c.l.b16 %v883
          %v948 = vunpack.c.l.b16 %v884
          %v949 = vunpack.c.l.b16 %v885
          %v950 = vunpack.c.l.b16 %v886
          %v951 = vunpack.c.l.b16 %v887
          %v952 = vunpack.c.l.b16 %v888
          %v953 = vunpack.c.l.b16 %v889
          %v954 = vunpack.c.l.b16 %v890
          %v955 = vunpack.c.l.b16 %v891
          %v956 = vunpack.c.l.b16 %v892
          %v957 = vunpack.c.l.b16 %v893
          %v958 = vunpack.c.l.b16 %v894
          %v959 = vunpack.c.l.b16 %v895
          %v960 = vunpack.c.l.b16 %v896
          %v961 = vunpack.c.l.b16 %v897
          %v962 = vunpack.c.l.b16 %v898
          %v963 = vunpack.c.l.b16 %v899
          %v964 = vunpack.c.l.b16 %v900
          %v965 = vunpack.c.l.b16 %v901
          %v966 = vunpack.c.l.b16 %v902
          %v967 = vunpack.c.l.b16 %v903
          %v968 = vunpack.c.l.b16 %v904
          %v969 = vunpack.c.l.b16 %v905
          %v970 = vunpack.c.l.b16 %v906
          %v971 = vunpack.c.l.b16 %v907
          %v972 = vunpack.c.l.b16 %v908
          %v973 = vunpack.c.l.b16 %v909
          %v974 = vunpack.c.l.b16 %v910
          %v975 = vunpack.c.l.b16 %v911
          %v976 = vunpack.c.l.b16 %v912
          %v977 = vunpack.c.l.b16 %v913
          %v978 = vpack.c.b16 %v947, %v946
          %v979 = vpack.c.b16 %v949, %v948
          %v980 = vpack.c.b16 %v951, %v950
          %v981 = vpack.c.b16 %v953, %v952
          %v982 = vpack.c.b16 %v955, %v954
          %v983 = vpack.c.b16 %v957, %v956
          %v984 = vpack.c.b16 %v959, %v958
          %v985 = vpack.c.b16 %v961, %v960
          %v986 = vpack.c.b16 %v963, %v962
          %v987 = vpack.c.b16 %v965, %v964
          %v988 = vpack.c.b16 %v967, %v966
          %v989 = vpack.c.b16 %v969, %v968
          %v990 = vpack.c.b16 %v971, %v970
          %v991 = vpack.c.b16 %v973, %v972
          %v992 = vpack.c.b16 %v975, %v974
          %v993 = vpack.c.b16 %v977, %v976
          %1010 = vmatprep.subr.bf16.mxu0 0
          %1011 = vmatpush1.bf16.msra.mxu0 %v978
          %1012 = vmatprep.subr.bf16.mxu0 0
          %1013 = vmatpush1.bf16.msra.mxu0 %v979
          %1014 = vmatprep.subr.bf16.mxu0 0
          %1015 = vmatpush1.bf16.msra.mxu0 %v980
          %1016 = vmatprep.subr.bf16.mxu0 0
          %1017 = vmatpush1.bf16.msra.mxu0 %v981
          %1018 = vmatprep.subr.bf16.mxu0 0
          %1019 = vmatpush1.bf16.msra.mxu0 %v982
          %1020 = vmatprep.subr.bf16.mxu0 0
          %1021 = vmatpush1.bf16.msra.mxu0 %v983
          %1022 = vmatprep.subr.bf16.mxu0 0
          %1023 = vmatpush1.bf16.msra.mxu0 %v984
          %1024 = vmatprep.subr.bf16.mxu0 0
          %1025 = vmatpush1.bf16.msra.mxu0 %v985
          %1026 = vmatprep.subr.bf16.mxu0 0
          %1027 = vmatpush1.bf16.msra.mxu0 %v986
          %1028 = vmatprep.subr.bf16.mxu0 0
          %1029 = vmatpush1.bf16.msra.mxu0 %v987
          %1030 = vmatprep.subr.bf16.mxu0 0
          %1031 = vmatpush1.bf16.msra.mxu0 %v988
          %1032 = vmatprep.subr.bf16.mxu0 0
          %1033 = vmatpush1.bf16.msra.mxu0 %v989
          %1034 = vmatprep.subr.bf16.mxu0 0
          %1035 = vmatpush1.bf16.msra.mxu0 %v990
          %1036 = vmatprep.subr.bf16.mxu0 0
          %1037 = vmatpush1.bf16.msra.mxu0 %v991
          %1038 = vmatprep.subr.bf16.mxu0 0
          %1039 = vmatpush1.bf16.msra.mxu0 %v992
          %1040 = vmatprep.subr.bf16.mxu0 0
          %1041 = vmatpush1.bf16.msra.mxu0 %v993
          %1042 = vmatprep.mubr.bf16.mxu0 %v331
          %1043 = vmatmul.mubr.bf16.gmra.mrb[0].mxu0 %v330
          %v1044 = vpop.f32.mrb[0].mxu0
          %v1045 = vadd.f32 0.0, %v1044
          %v1046 = vpop.f32.mrb[0].mxu0
          %v1047 = vpop.f32.mrb[0].mxu0
          %v1048 = vadd.f32 0.0, %v1047
          %v1049 = vpop.f32.mrb[0].mxu0
          %1050 = vdwg.mxu0
          %v1051 = vpack.c.bf16 %v1048, %v1045
          %v1052 = vunpack.c.l.bf16 %v1051
          %v1053 = vunpack.c.h.bf16 %v1051
          %v1054 = vmul.f32 %v1052, %v1052
          %v1055 = vmul.f32 %v1053, %v1053
          %1056 = vadd.xlane.f32.xlu0 %v1054
          %v1057 = vpop.xlane.xlu0 %1056
          %1058 = vadd.xlane.f32.xlu0 %v1055
          %v1059 = vpop.xlane.xlu0 %1058
          %v1060 = vmul.f32 %v1057, %v480
          %v1061 = vmul.f32 %v1059, %v480
          %v1062 = vadd.f32 %v1060, 1e-06
          %v1063 = vadd.f32 %v1061, 1e-06
          %v1064 = vrsqrt.pop %v1062
          %v1065 = vrsqrt.pop %v1063
          %v1066 = vmul.f32 %v1052, %v1064
          %v1067 = vmul.f32 %v1053, %v1065
          %v1068 = vmul.f32 %v1066, %v493
          %v1069 = vmul.f32 %v1067, %v493
          %v1070 = vpack.c.bf16 %v1069, %v1068
          %1071 = vst [vmem:[#allocation2 + $0x18] sm:$0xff] %v1070
        $region52: #{tpu_custom_call.1} parent=35 // pred_fallthru
          _
        %v1072 = vld [vmem:[#allocation2] sm:$0xff]
        %v1073 = vld [vmem:[#allocation2 + $0x8] sm:$0xff]
        %v1074 = vld [vmem:[#allocation2 + $0x10] sm:$0xff]
        %v1075 = vld [vmem:[#allocation2 + $0x18] sm:$0xff]
        %v1076 = vld [vmem:[%s252] sm:$0xf]
        %v1077 = vld [vmem:[%s252 + $0x4] sm:$0xf]
        %v1078 = vld [vmem:[%s252 + $0x8] sm:$0xf]
        %v1079 = vld [vmem:[%s252 + $0xc] sm:$0xf]
        %v1080 = vld [vmem:[%s252 + $0x10] sm:$0xf]
        %v1081 = vld [vmem:[%s252 + $0x14] sm:$0xf]
        %v1082 = vld [vmem:[%s252 + $0x18] sm:$0xf]
        %v1083 = vld [vmem:[%s252 + $0x1c] sm:$0xf]
        %v1084 = vld [vmem:[%s252 + $0x20] sm:$0xf]
        %v1085 = vld [vmem:[%s252 + $0x24] sm:$0xf]
        %v1086 = vld [vmem:[%s252 + $0x28] sm:$0xf]
        %v1087 = vld [vmem:[%s252 + $0x2c] sm:$0xf]
        %v1088 = vld [vmem:[%s252 + $0x30] sm:$0xf]
        %v1089 = vld [vmem:[%s252 + $0x34] sm:$0xf]
        %v1090 = vld [vmem:[%s252 + $0x38] sm:$0xf]
        %v1091 = vld [vmem:[%s252 + $0x3c] sm:$0xf]
        %v1108 = vunpack.c.l.b16 %v1076
        %v1109 = vunpack.c.l.b16 %v1077
        %v1110 = vunpack.c.l.b16 %v1078
        %v1111 = vunpack.c.l.b16 %v1079
        %v1112 = vunpack.c.l.b16 %v1080
        %v1113 = vunpack.c.l.b16 %v1081
        %v1114 = vunpack.c.l.b16 %v1082
        %v1115 = vunpack.c.l.b16 %v1083
        %v1116 = vunpack.c.l.b16 %v1084
        %v1117 = vunpack.c.l.b16 %v1085
        %v1118 = vunpack.c.l.b16 %v1086
        %v1119 = vunpack.c.l.b16 %v1087
        %v1120 = vunpack.c.l.b16 %v1088
        %v1121 = vunpack.c.l.b16 %v1089
        %v1122 = vunpack.c.l.b16 %v1090
        %v1123 = vunpack.c.l.b16 %v1091
        %v1124 = vpack.c.b16 %v1109, %v1108
        %v1125 = vpack.c.b16 %v1111, %v1110
        %v1126 = vpack.c.b16 %v1113, %v1112
        %v1127 = vpack.c.b16 %v1115, %v1114
        %v1128 = vpack.c.b16 %v1117, %v1116
        %v1129 = vpack.c.b16 %v1119, %v1118
        %v1130 = vpack.c.b16 %v1121, %v1120
        %v1131 = vpack.c.b16 %v1123, %v1122
        %1140 = vmatprep.subr.bf16.mxu0 0
        %1141 = vmatpush1.bf16.msra.mxu0 %v1124
        %1142 = vmatprep.subr.bf16.mxu0 0
        %1143 = vmatpush1.bf16.msra.mxu0 %v1125
        %1144 = vmatprep.subr.bf16.mxu0 0
        %1145 = vmatpush1.bf16.msra.mxu0 %v1126
        %1146 = vmatprep.subr.bf16.mxu0 0
        %1147 = vmatpush1.bf16.msra.mxu0 %v1127
        %1148 = vmatprep.subr.bf16.mxu0 0
        %1149 = vmatpush1.bf16.msra.mxu0 %v1128
        %1150 = vmatprep.subr.bf16.mxu0 0
        %1151 = vmatpush1.bf16.msra.mxu0 %v1129
        %1152 = vmatprep.subr.bf16.mxu0 0
        %1153 = vmatpush1.bf16.msra.mxu0 %v1130
        %1154 = vmatprep.subr.bf16.mxu0 0
        %1155 = vmatpush1.bf16.msra.mxu0 %v1131
        %1156 = vmatprep.subr.bf16.mxu0 0
        %1157 = vmatpush1.bf16.msra.mxu0 0
        %1158 = vmatprep.subr.bf16.mxu0 0
        %1159 = vmatpush1.bf16.msra.mxu0 0
        %1160 = vmatprep.subr.bf16.mxu0 0
        %1161 = vmatpush1.bf16.msra.mxu0 0
        %1162 = vmatprep.subr.bf16.mxu0 0
        %1163 = vmatpush1.bf16.msra.mxu0 0
        %1164 = vmatprep.subr.bf16.mxu0 0
        %1165 = vmatpush1.bf16.msra.mxu0 0
        %1166 = vmatprep.subr.bf16.mxu0 0
        %1167 = vmatpush1.bf16.msra.mxu0 0
        %1168 = vmatprep.subr.bf16.mxu0 0
        %1169 = vmatpush1.bf16.msra.mxu0 0
        %1170 = vmatprep.subr.bf16.mxu0 0
        %1171 = vmatpush1.bf16.msra.mxu0 0
        %1172 = vmatprep.mubr.bf16.mxu0 0
        %1173 = vmatmul.mubr.bf16.gmra.mrb[0].mxu0 %v1072
        %v1174 = vpop.f32.mrb[0].mxu0
        %v1175 = vadd.f32 0.0, %v1174
        %v1176 = vpop.f32.mrb[0].mxu0
        %v1177 = vpop.f32.mrb[0].mxu0
        %v1178 = vadd.f32 0.0, %v1177
        %v1179 = vpop.f32.mrb[0].mxu0
        %1180 = vmatprep.mubr.bf16.mxu0 0
        %1181 = vmatmul.mubr.bf16.gmra.mrb[0].mxu0 %v1073
        %v1182 = vpop.f32.mrb[0].mxu0
        %v1183 = vadd.f32 0.0, %v1182
        %v1184 = vpop.f32.mrb[0].mxu0
        %v1185 = vpop.f32.mrb[0].mxu0
        %v1186 = vadd.f32 0.0, %v1185
        %v1187 = vpop.f32.mrb[0].mxu0
        %1188 = vmatprep.mubr.bf16.mxu0 0
        %1189 = vmatmul.mubr.bf16.gmra.mrb[0].mxu0 %v1074
        %v1190 = vpop.f32.mrb[0].mxu0
        %v1191 = vadd.f32 0.0, %v1190
        %v1192 = vpop.f32.mrb[0].mxu0
        %v1193 = vpop.f32.mrb[0].mxu0
        %v1194 = vadd.f32 0.0, %v1193
        %v1195 = vpop.f32.mrb[0].mxu0
        %1196 = vmatprep.mubr.bf16.mxu0 0
        %1197 = vmatmul.mubr.bf16.gmra.mrb[0].mxu0 %v1075
        %v1198 = vpop.f32.mrb[0].mxu0
        %v1199 = vadd.f32 0.0, %v1198
        %v1200 = vpop.f32.mrb[0].mxu0
        %v1201 = vpop.f32.mrb[0].mxu0
        %v1202 = vadd.f32 0.0, %v1201
        %v1203 = vpop.f32.mrb[0].mxu0
        %1204 = vdwg.mxu0
        %v1205 = vpack.c.bf16 %v1178, %v1175
        %v1206 = vpack.c.bf16 %v1186, %v1183
        %v1207 = vpack.c.bf16 %v1194, %v1191
        %v1208 = vpack.c.bf16 %v1202, %v1199
        %v1213 = vunpack.c.l.b16 %v1205
        %v1214 = vunpack.c.h.b16 %v1205
        %v1215 = vunpack.c.l.b16 %v1206
        %v1216 = vunpack.c.h.b16 %v1206
        %v1217 = vunpack.c.l.b16 %v1207
        %v1218 = vunpack.c.h.b16 %v1207
        %v1219 = vunpack.c.l.b16 %v1208
        %v1220 = vunpack.c.h.b16 %v1208
        %v1221 = vpack.c.b16 %v1213, %v1213
        %v1222 = vpack.c.b16 %v1214, %v1214
        %v1223 = vpack.c.b16 %v1215, %v1215
        %v1224 = vpack.c.b16 %v1216, %v1216
        %v1225 = vpack.c.b16 %v1217, %v1217
        %v1226 = vpack.c.b16 %v1218, %v1218
        %v1227 = vpack.c.b16 %v1219, %v1219
        %v1228 = vpack.c.b16 %v1220, %v1220
        %1237 = vst [vmem:[%s281] sm:$0xf] %v1221
        %1238 = vst [vmem:[%s281 + $0x4] sm:$0xf] %v1222
        %1239 = vst [vmem:[%s281 + $0x8] sm:$0xf] %v1223
        %1240 = vst [vmem:[%s281 + $0xc] sm:$0xf] %v1224
        %1241 = vst [vmem:[%s281 + $0x10] sm:$0xf] %v1225
        %1242 = vst [vmem:[%s281 + $0x14] sm:$0xf] %v1226
        %1243 = vst [vmem:[%s281 + $0x18] sm:$0xf] %v1227
        %1244 = vst [vmem:[%s281 + $0x1c] sm:$0xf] %v1228
        %s1245 = sand.u32 %s138, 1
        %s1246 = scalar_lea.sflag [#allocation5], %s1245
        %s1247 = sand.u32 %s138, 1
        %s1248 = smul.addr %s1247, 32
        %s1249 = scalar_lea.vmem [#allocation9], %s1248
        // Predicated region
        $region53: #{tpu_custom_call.1} parent=35 // pred_check
          %p1250 = pneg %p148
        $region54: #{tpu_custom_call.1} parent=35 // pred_check_branch
          %1252 = sbr.rel (%p1250) target = $region56
        $region55: #{tpu_custom_call.1} parent=35 // pred_region
          %s1253 = smul.u32 4, %s26
          %s1255 = ssub.s32 512, 512
          %1256 = vsyncadd %s1246, %s1255
          %s1257 = smul.addr %s1253, 4
          %s1258 = sadd.s32 %s27, %s1257
          %s1259 = smul.addr %s1258, 64
          %s1260 = scalar_lea.hbm %s4, %s1259
          %s1261 = sshll.u32 %s1249, 4
          %s1262 = int_to_ptr.vmem [resolvable:$true] %s1261
          %1267 = dma.vmem_to_hbm [thread:$0]  %s1262, 512, %s1260, %s1246, 64, 128, 4
        $region56: #{tpu_custom_call.1} parent=35 // pred_fallthru
          _
      $region36: #{tpu_custom_call.1} parent=5 // pred_fallthru
        _
      %p1268 = scmp.le.s32.totalorder 2, %s17
      // Predicated region
      $region57: #{tpu_custom_call.1} parent=5 // pred_check
        %p1269 = pneg %p1268
      $region58: #{tpu_custom_call.1} parent=5 // pred_check_branch
        %1271 = sbr.rel (%p1269) target = $region60
      $region59: #{tpu_custom_call.1} parent=5 // pred_region
        %s1272 = ssub.s32 %s17, 2
        // Predicated region
        $region61: #{tpu_custom_call.1} parent=59 // pred_check
          %p1273 = pneg %p154
        $region62: #{tpu_custom_call.1} parent=59 // pred_check_branch
          %1275 = sbr.rel (%p1273) target = $region64
        $region63: #{tpu_custom_call.1} parent=59 // pred_region
          %s1276 = sand.u32 %s139, 1
          %s1277 = scalar_lea.sflag [#allocation5], %s1276
          %s1278 = sand.u32 %s139, 1
          %s1279 = smul.addr %s1278, 32
          %s1280 = scalar_lea.vmem [#allocation9], %s1279
          %1281 = dma.done %s1277, 512
        $region64: #{tpu_custom_call.1} parent=59 // pred_fallthru
          _
      $region60: #{tpu_custom_call.1} parent=5 // pred_fallthru
        _
    $region6: #{tpu_custom_call.1} parent=1 // loop_footer
      %s21 = sadd.s32 1, %s17
    $region7: #{tpu_custom_call.1} parent=1 // loop_footer_branch
      %16 = sbr.rel target = $region3
    $region8: #{tpu_custom_call.1} parent=1 // loop_exit
      _
    %1282 = vsyncpa [#allocation4], 1
    %s1283 = scalar_lea.sflag [#allocation4], 1
    %1284 = vsyncpa %s1283, 1
    %1285 = vsyncpa [#allocation7], 1
    %1286 = vsyncpa [#allocation5], 1
    %s1287 = scalar_lea.sflag [#allocation5], 1
    %1288 = vsyncpa %s1287, 1

</llo_original>
